<compile_context>
chip_gen: v7x
topology: tpu7x:2x2x1
jax: 0.10.0
libtpu: 0.0.40
codegen_flags: <defaults>
</compile_context>

<pallas_src>
import jax
import jax.numpy as jnp
from jax.experimental import pallas as pl
from jax.experimental.pallas import tpu as pltpu

KERNEL_SIZE = 16
PADDING = KERNEL_SIZE // 2   # = 8 -> L_out = L + 1 (PyTorch even-kernel + K//2 padding)

_MM_CHUNK = 512    # matmul column chunk (multiple of 128)
_RED_CHUNK = 512   # tap-reduction / epilogue column chunk (multiple of 128)


def _round_up(v, m):
    return (v + m - 1) // m * m


def conv_block_kernel(x_ref, w_ref, scale_ref, shift_ref, o_ref, xpad_ref, p_ref):
    # x_ref:     (NB, C_in, L)           NB batch elements, unpadded input
    # w_ref:     (K*C_outP, C_inP)       w_ref[t*C_outP + o, i] = weight[o, i, t]
    # scale_ref: (C_outP, 1) f32         gamma / sqrt(var + eps)
    # shift_ref: (C_outP, 1) f32         beta + (conv_bias - mean) * scale
    # o_ref:     (NB, C_outP, L_outP)
    # xpad_ref:  (C_inP, W) scratch      halo-padded input, W = L_outP + 128
    # p_ref:     (K*C_outP, W) f32 scratch  per-tap channel-contraction result
    nb, c_in, length = x_ref.shape
    c_in_pad, w_p = xpad_ref.shape
    cop = o_ref.shape[1]
    l_out_pad = o_ref.shape[2]

    # --- Zero only what the per-step data copy never overwrites (a few vregs; the old
    #     full-slab zero was 8-16x larger).  Done every step, not once at program_id==0,
    #     because with a "parallel" batch axis a second TensorCore never sees step 0. ---
    if c_in_pad > c_in:
        # Padded channel rows multiply zero weight columns, but uninitialized VMEM may
        # hold NaNs (0*NaN=NaN), so they must be zeroed.
        xpad_ref[c_in:, :] = jnp.zeros((c_in_pad - c_in, w_p), xpad_ref.dtype)
    xpad_ref[:c_in, :PADDING] = jnp.zeros((c_in, PADDING), xpad_ref.dtype)
    xpad_ref[:c_in, PADDING + length:] = jnp.zeros(
        (c_in, w_p - PADDING - length), xpad_ref.dtype)

    for bi in range(nb):
        # Stage this element once (single cast, bounded live range): x_pad[:, c] = x[:, c-P].
        xpad_ref[:c_in, PADDING:PADDING + length] = x_ref[bi].astype(xpad_ref.dtype)

        # Channel-contraction matmul, column-chunked:
        #   P[t*C_outP + o, c] = sum_i w[o, i, t] * x_pad[i, c]
        # Pushed RHS block is only C_inP(=8) rows per 128 output columns; the reused
        # weight streams through as LHS -> low vector-extended (push) slot pressure.
        for c0 in range(0, w_p, _MM_CHUNK):
            c1 = min(c0 + _MM_CHUNK, w_p)
            p_ref[:, c0:c1] = jnp.dot(
                w_ref[...], xpad_ref[:, c0:c1], preferred_element_type=jnp.float32)

        # Shift-and-add tap reduction + fused BN/ReLU epilogue, column-chunked:
        #   y[o, j] = relu( scale[o] * sum_t P[t*C_outP + o, j + t] + shift[o] )
        for c0 in range(0, l_out_pad, _RED_CHUNK):
            c1 = min(c0 + _RED_CHUNK, l_out_pad)
            acc = p_ref[0:cop, c0:c1]                       # f32
            for t in range(1, KERNEL_SIZE):
                # Static lane-misaligned loads: realignment goes to the (idle) XLU,
                # the accumulate to the VPU; no masked stores involved.
                acc = acc + p_ref[t * cop:(t + 1) * cop, c0 + t:c1 + t]
            y = jnp.maximum(acc * scale_ref[...] + shift_ref[...], 0.0)
            o_ref[bi, :, c0:c1] = y.astype(o_ref.dtype)
    # TODO(synk): Dropout is identity in eval mode; training-mode random masking and
    # BatchNorm training-mode batch statistics are not implemented.


def conv_block(x, weight, conv_bias, gamma, beta, run_mean, run_var, eps=1e-5,
               *, compute_dtype=jnp.bfloat16, batch_block=1, out_dtype=None,
               return_padded=False):
    """x: (N, C_in, L); weight: (C_out, C_in, K). Returns (N, C_out, L + 1)."""
    n, c_in, length = x.shape
    c_out, c_in_w, k = weight.shape
    assert k == KERNEL_SIZE and c_in_w == c_in
    assert n % batch_block == 0, "batch_block must divide the batch size"
    out_dtype = x.dtype if out_dtype is None else out_dtype

    l_out = length + 2 * PADDING - KERNEL_SIZE + 1
    c_in_pad = _round_up(c_in, 8)          # one sublane group for the contraction
    c_out_pad = _round_up(c_out, 8)
    l_out_pad = _round_up(l_out, 128)      # lane-dense output stores
    w_p = l_out_pad + 128                  # headroom for the up-to-(K-1) shifted reads
    # TODO(synk): for very long sequences add an L-tile grid axis with a K-1 column
    # input halo instead of growing the (K*C_outP, W) scratch (v7x: 64 MiB VMEM).

    # Weight in "per-tap channel matmul" layout: w_r[t*C_outP + o, i] = weight[o, i, t].
    w_t = jnp.transpose(weight, (2, 0, 1))                                  # (K, C_out, C_in)
    w_t = jnp.pad(w_t, ((0, 0), (0, c_out_pad - c_out), (0, c_in_pad - c_in)))
    w_r = w_t.reshape(KERNEL_SIZE * c_out_pad, c_in_pad).astype(compute_dtype)

    # BatchNorm (eval) as an affine epilogue applied in f32 inside the kernel
    # (keeping the bf16 weight unscaled avoids extra quantization error).
    scale = (gamma / jnp.sqrt(run_var + eps)).astype(jnp.float32)           # (C_out,)
    shift = (beta + (conv_bias - run_mean) * scale).astype(jnp.float32)     # (C_out,)
    scale_p = jnp.pad(scale, (0, c_out_pad - c_out)).reshape(c_out_pad, 1)
    shift_p = jnp.pad(shift, (0, c_out_pad - c_out)).reshape(c_out_pad, 1)

    nb = batch_block
    xb = jnp.dtype(x.dtype).itemsize
    ob = jnp.dtype(out_dtype).itemsize
    cb = jnp.dtype(compute_dtype).itemsize
    vmem_bytes = (
        2 * nb * c_in * length * xb                          # x blocks (double-buffered)
        + 2 * nb * c_out_pad * l_out_pad * ob                # out blocks
        + 2 * KERNEL_SIZE * c_out_pad * c_in_pad * cb        # weight (resident)
        + 4 * c_out_pad * 4                                  # scale + shift
        + c_in_pad * w_p * cb                                # x_pad scratch
        + KERNEL_SIZE * c_out_pad * w_p * 4                  # P scratch (f32)
    )
    vmem_limit = int(min(vmem_bytes + (4 << 20), 128 << 20))

    out = pl.pallas_call(
        conv_block_kernel,
        out_shape=jax.ShapeDtypeStruct((n, c_out_pad, l_out_pad), out_dtype),
        grid_spec=pltpu.PrefetchScalarGridSpec(
            num_scalar_prefetch=0,
            grid=(n // nb,),
            in_specs=[
                # (if DMA latency shows exposed for tiny blocks, add
                #  pipeline_mode=pl.Buffered(3) on this x spec)
                pl.BlockSpec((nb, c_in, length), lambda b: (b, 0, 0)),
                pl.BlockSpec((KERNEL_SIZE * c_out_pad, c_in_pad), lambda b: (0, 0)),
                pl.BlockSpec((c_out_pad, 1), lambda b: (0, 0)),
                pl.BlockSpec((c_out_pad, 1), lambda b: (0, 0)),
            ],
            out_specs=pl.BlockSpec((nb, c_out_pad, l_out_pad), lambda b: (b, 0, 0)),
            scratch_shapes=[
                pltpu.VMEM((c_in_pad, w_p), compute_dtype),
                pltpu.VMEM((KERNEL_SIZE * c_out_pad, w_p), jnp.float32),
            ],
        ),
        compiler_params=pltpu.CompilerParams(
            dimension_semantics=("parallel",),
            vmem_limit_bytes=vmem_limit,
        ),
    )(x, w_r, scale_p, shift_p)

    if return_padded:
        # Skips the extra HBM read+write of the slice below; consumer must ignore
        # channels >= c_out and columns >= l_out (they hold relu(shift)).
        return out
    return out[:, :c_out, :l_out]


def ref_conv_block(x, weight, conv_bias, gamma, beta, run_mean, run_var, eps=1e-5):
    y = jax.lax.conv_general_dilated(
        x, weight, window_strides=(1,), padding=[(PADDING, PADDING)],
        dimension_numbers=("NCH", "OIH", "NCH"))
    y = y + conv_bias[None, :, None]
    y = (y - run_mean[None, :, None]) / jnp.sqrt(run_var[None, :, None] + eps)
    y = y * gamma[None, :, None] + beta[None, :, None]
    return jnp.maximum(y, 0.0)


if __name__ == "__main__":
    N, C_IN, C_OUT, L = 2, 4, 8, 16

    key = jax.random.PRNGKey(0)
    kx, kw, kb, kg, kbt, km, kv = jax.random.split(key, 7)

    x = jax.random.normal(kx, (N, C_IN, L), dtype=jnp.float32)
    # Conv1d parameter shapes: weight (C_out, C_in, K), bias (C_out,)
    weight = jax.random.normal(kw, (C_OUT, C_IN, KERNEL_SIZE), dtype=jnp.float32) * 0.1
    conv_bias = jax.random.normal(kb, (C_OUT,), dtype=jnp.float32) * 0.1
    # BatchNorm1d parameters / running stats (deterministic, non-trivial)
    gamma = 1.0 + 0.1 * jax.random.normal(kg, (C_OUT,), dtype=jnp.float32)
    beta = 0.1 * jax.random.normal(kbt, (C_OUT,), dtype=jnp.float32)
    run_mean = 0.1 * jax.random.normal(km, (C_OUT,), dtype=jnp.float32)
    run_var = 1.0 + 0.1 * jax.random.uniform(kv, (C_OUT,), dtype=jnp.float32)

    ref = ref_conv_block(x, weight, conv_bias, gamma, beta, run_mean, run_var)

    # f32 MXU operands, one batch element per grid step (2 steps -> megacore-friendly).
    out_f32 = jax.block_until_ready(
        conv_block(x, weight, conv_bias, gamma, beta, run_mean, run_var,
                   compute_dtype=jnp.float32, batch_block=1))
    assert out_f32.shape == (N, C_OUT, L + 1), out_f32.shape
    assert jnp.allclose(out_f32, ref, atol=1e-4, rtol=1e-4), "f32 mismatch vs reference"

    # bf16 MXU operands (f32 accumulate + f32 BN epilogue), 2 batch elements per step
    # (exercises the NB>1 per-step batching path).
    out_bf16 = jax.block_until_ready(
        conv_block(x, weight, conv_bias, gamma, beta, run_mean, run_var,
                   compute_dtype=jnp.bfloat16, batch_block=2))
    assert out_bf16.shape == (N, C_OUT, L + 1), out_bf16.shape
    assert jnp.allclose(out_bf16, ref, atol=5e-2, rtol=5e-2), "bf16 mismatch vs reference"

    print("KERNEL_OK")
</pallas_src>

<mosaic_0001>
module attributes {stable_mosaic.version = 11 : i64} {
  func.func @conv_block_kernel(%arg0: i32, %arg1: memref<1x4x16xf32, #tpu.memory_space<vmem>>, %arg2: memref<128x8xf32, #tpu.memory_space<vmem>>, %arg3: memref<8x1xf32, #tpu.memory_space<vmem>>, %arg4: memref<8x1xf32, #tpu.memory_space<vmem>>, %arg5: memref<1x8x128xf32, #tpu.memory_space<vmem>>, %arg6: memref<8x256xf32, #tpu.memory_space<vmem>>, %arg7: memref<128x256xf32, #tpu.memory_space<vmem>>) attributes {dimension_semantics = [#tpu.dimension_semantics<parallel>], iteration_bounds = array<i64: 2>, scalar_prefetch = 0 : i64, scratch_operands = 2 : i64, tpu.core_type = #tpu.core_type<tc>, window_params = [{transform_indices = @transform_0, window_bounds = array<i64: 1, 4, 16>}, {pipeline_mode = #tpu.pipeline_mode<synchronous>, transform_indices = @transform_1, window_bounds = array<i64: 128, 8>}, {pipeline_mode = #tpu.pipeline_mode<synchronous>, transform_indices = @transform_2, window_bounds = array<i64: 8, 1>}, {pipeline_mode = #tpu.pipeline_mode<synchronous>, transform_indices = @transform_3, window_bounds = array<i64: 8, 1>}, {transform_indices = @transform_4, window_bounds = array<i64: 1, 8, 128>}]} {
    %cst = arith.constant 0.000000e+00 : f32
    %0 = vector.broadcast %cst : f32 to vector<4x256xf32>
    %c4 = arith.constant 4 : index
    %c0 = arith.constant 0 : index
    %1 = vector.load %arg6[%c4, %c0] : memref<8x256xf32, #tpu.memory_space<vmem>>, vector<4x256xf32>
    tpu.vector_store %arg6[%c4, %c0], %0 {strides = array<i32>} : memref<8x256xf32, #tpu.memory_space<vmem>>, vector<4x256xf32>,
    %cst_0 = arith.constant 0.000000e+00 : f32
    %2 = vector.broadcast %cst_0 : f32 to vector<4x8xf32>
    %c0_1 = arith.constant 0 : index
    %c0_2 = arith.constant 0 : index
    %3 = vector.load %arg6[%c0_1, %c0_2] : memref<8x256xf32, #tpu.memory_space<vmem>>, vector<4x8xf32>
    tpu.vector_store %arg6[%c0_1, %c0_2], %2 {strides = array<i32>} : memref<8x256xf32, #tpu.memory_space<vmem>>, vector<4x8xf32>,
    %cst_3 = arith.constant 0.000000e+00 : f32
    %4 = vector.broadcast %cst_3 : f32 to vector<4x232xf32>
    %c0_4 = arith.constant 0 : index
    %c24 = arith.constant 24 : index
    %5 = vector.load %arg6[%c0_4, %c24] : memref<8x256xf32, #tpu.memory_space<vmem>>, vector<4x232xf32>
    tpu.vector_store %arg6[%c0_4, %c24], %4 {strides = array<i32>} : memref<8x256xf32, #tpu.memory_space<vmem>>, vector<4x232xf32>,
    %c0_5 = arith.constant 0 : index
    %c0_6 = arith.constant 0 : index
    %c0_7 = arith.constant 0 : index
    %6 = vector.load %arg1[%c0_5, %c0_6, %c0_7] : memref<1x4x16xf32, #tpu.memory_space<vmem>>, vector<1x4x16xf32>
    %7 = vector.shape_cast %6 : vector<1x4x16xf32> to vector<4x16xf32>
    %c0_8 = arith.constant 0 : index
    %c8 = arith.constant 8 : index
    %8 = vector.load %arg6[%c0_8, %c8] : memref<8x256xf32, #tpu.memory_space<vmem>>, vector<4x16xf32>
    tpu.vector_store %arg6[%c0_8, %c8], %7 {strides = array<i32>} : memref<8x256xf32, #tpu.memory_space<vmem>>, vector<4x16xf32>,
    %c0_9 = arith.constant 0 : index
    %c0_10 = arith.constant 0 : index
    %9 = vector.load %arg2[%c0_9, %c0_10] : memref<128x8xf32, #tpu.memory_space<vmem>>, vector<128x8xf32>
    %c0_11 = arith.constant 0 : index
    %c0_12 = arith.constant 0 : index
    %10 = vector.load %arg6[%c0_11, %c0_12] : memref<8x256xf32, #tpu.memory_space<vmem>>, vector<8x256xf32>
    %cst_13 = arith.constant dense<0.000000e+00> : vector<128x256xf32>
    %11 = tpu.matmul %9, %10, %cst_13 {dimension_numbers = #tpu.dot_dimension_numbers<[1], [0], [0], [1], [0, 0, 1, 1], [], []>} : vector<128x8xf32>, vector<8x256xf32>, vector<128x256xf32> -> vector<128x256xf32>
    %c0_14 = arith.constant 0 : index
    %c0_15 = arith.constant 0 : index
    %12 = vector.load %arg7[%c0_14, %c0_15] : memref<128x256xf32, #tpu.memory_space<vmem>>, vector<128x256xf32>
    tpu.vector_store %arg7[%c0_14, %c0_15], %11 {strides = array<i32>} : memref<128x256xf32, #tpu.memory_space<vmem>>, vector<128x256xf32>,
    %c0_16 = arith.constant 0 : index
    %c0_17 = arith.constant 0 : index
    %13 = vector.load %arg7[%c0_16, %c0_17] : memref<128x256xf32, #tpu.memory_space<vmem>>, vector<8x128xf32>
    %c8_18 = arith.constant 8 : index
    %c1 = arith.constant 1 : index
    %14 = vector.load %arg7[%c8_18, %c1] : memref<128x256xf32, #tpu.memory_space<vmem>>, vector<8x128xf32>
    %15 = arith.addf %13, %14 : vector<8x128xf32>
    %c16 = arith.constant 16 : index
    %c2 = arith.constant 2 : index
    %16 = vector.load %arg7[%c16, %c2] : memref<128x256xf32, #tpu.memory_space<vmem>>, vector<8x128xf32>
    %17 = arith.addf %15, %16 : vector<8x128xf32>
    %c24_19 = arith.constant 24 : index
    %c3 = arith.constant 3 : index
    %18 = vector.load %arg7[%c24_19, %c3] : memref<128x256xf32, #tpu.memory_space<vmem>>, vector<8x128xf32>
    %19 = arith.addf %17, %18 : vector<8x128xf32>
    %c32 = arith.constant 32 : index
    %c4_20 = arith.constant 4 : index
    %20 = vector.load %arg7[%c32, %c4_20] : memref<128x256xf32, #tpu.memory_space<vmem>>, vector<8x128xf32>
    %21 = arith.addf %19, %20 : vector<8x128xf32>
    %c40 = arith.constant 40 : index
    %c5 = arith.constant 5 : index
    %22 = vector.load %arg7[%c40, %c5] : memref<128x256xf32, #tpu.memory_space<vmem>>, vector<8x128xf32>
    %23 = arith.addf %21, %22 : vector<8x128xf32>
    %c48 = arith.constant 48 : index
    %c6 = arith.constant 6 : index
    %24 = vector.load %arg7[%c48, %c6] : memref<128x256xf32, #tpu.memory_space<vmem>>, vector<8x128xf32>
    %25 = arith.addf %23, %24 : vector<8x128xf32>
    %c56 = arith.constant 56 : index
    %c7 = arith.constant 7 : index
    %26 = vector.load %arg7[%c56, %c7] : memref<128x256xf32, #tpu.memory_space<vmem>>, vector<8x128xf32>
    %27 = arith.addf %25, %26 : vector<8x128xf32>
    %c64 = arith.constant 64 : index
    %c8_21 = arith.constant 8 : index
    %28 = vector.load %arg7[%c64, %c8_21] : memref<128x256xf32, #tpu.memory_space<vmem>>, vector<8x128xf32>
    %29 = arith.addf %27, %28 : vector<8x128xf32>
    %c72 = arith.constant 72 : index
    %c9 = arith.constant 9 : index
    %30 = vector.load %arg7[%c72, %c9] : memref<128x256xf32, #tpu.memory_space<vmem>>, vector<8x128xf32>
    %31 = arith.addf %29, %30 : vector<8x128xf32>
    %c80 = arith.constant 80 : index
    %c10 = arith.constant 10 : index
    %32 = vector.load %arg7[%c80, %c10] : memref<128x256xf32, #tpu.memory_space<vmem>>, vector<8x128xf32>
    %33 = arith.addf %31, %32 : vector<8x128xf32>
    %c88 = arith.constant 88 : index
    %c11 = arith.constant 11 : index
    %34 = vector.load %arg7[%c88, %c11] : memref<128x256xf32, #tpu.memory_space<vmem>>, vector<8x128xf32>
    %35 = arith.addf %33, %34 : vector<8x128xf32>
    %c96 = arith.constant 96 : index
    %c12 = arith.constant 12 : index
    %36 = vector.load %arg7[%c96, %c12] : memref<128x256xf32, #tpu.memory_space<vmem>>, vector<8x128xf32>
    %37 = arith.addf %35, %36 : vector<8x128xf32>
    %c104 = arith.constant 104 : index
    %c13 = arith.constant 13 : index
    %38 = vector.load %arg7[%c104, %c13] : memref<128x256xf32, #tpu.memory_space<vmem>>, vector<8x128xf32>
    %39 = arith.addf %37, %38 : vector<8x128xf32>
    %c112 = arith.constant 112 : index
    %c14 = arith.constant 14 : index
    %40 = vector.load %arg7[%c112, %c14] : memref<128x256xf32, #tpu.memory_space<vmem>>, vector<8x128xf32>
    %41 = arith.addf %39, %40 : vector<8x128xf32>
    %c120 = arith.constant 120 : index
    %c15 = arith.constant 15 : index
    %42 = vector.load %arg7[%c120, %c15] : memref<128x256xf32, #tpu.memory_space<vmem>>, vector<8x128xf32>
    %43 = arith.addf %41, %42 : vector<8x128xf32>
    %c0_22 = arith.constant 0 : index
    %c0_23 = arith.constant 0 : index
    %44 = vector.load %arg3[%c0_22, %c0_23] : memref<8x1xf32, #tpu.memory_space<vmem>>, vector<8x1xf32>
    %45 = vector.broadcast %44 : vector<8x1xf32> to vector<8x128xf32>
    %46 = arith.mulf %43, %45 : vector<8x128xf32>
    %c0_24 = arith.constant 0 : index
    %c0_25 = arith.constant 0 : index
    %47 = vector.load %arg4[%c0_24, %c0_25] : memref<8x1xf32, #tpu.memory_space<vmem>>, vector<8x1xf32>
    %48 = vector.broadcast %47 : vector<8x1xf32> to vector<8x128xf32>
    %49 = arith.addf %46, %48 : vector<8x128xf32>
    %cst_26 = arith.constant 0.000000e+00 : f32
    %50 = vector.broadcast %cst_26 : f32 to vector<8x128xf32>
    %51 = arith.maximumf %49, %50 : vector<8x128xf32>
    %c0_27 = arith.constant 0 : index
    %c0_28 = arith.constant 0 : index
    %c0_29 = arith.constant 0 : index
    %52 = vector.load %arg5[%c0_27, %c0_28, %c0_29] : memref<1x8x128xf32, #tpu.memory_space<vmem>>, vector<1x8x128xf32>
    %53 = vector.shape_cast %52 : vector<1x8x128xf32> to vector<8x128xf32>
    %54 = vector.shape_cast %51 : vector<8x128xf32> to vector<1x8x128xf32>
    tpu.vector_store %arg5[%c0_27, %c0_28, %c0_29], %54 {strides = array<i32>} : memref<1x8x128xf32, #tpu.memory_space<vmem>>, vector<1x8x128xf32>,
    return
  }
  func.func @transform_0(%arg0: i32) -> (i32, i32, i32) {
    %c0_i32 = arith.constant 0 : i32
    %c0_i32_0 = arith.constant 0 : i32
    %c0_i32_1 = arith.constant 0 : i32
    return %arg0, %c0_i32, %c0_i32_0 : i32, i32, i32
  }
  func.func @transform_1(%arg0: i32) -> (i32, i32) {
    %c0_i32 = arith.constant 0 : i32
    %c0_i32_0 = arith.constant 0 : i32
    %c0_i32_1 = arith.constant 0 : i32
    return %c0_i32, %c0_i32_0 : i32, i32
  }
  func.func @transform_2(%arg0: i32) -> (i32, i32) {
    %c0_i32 = arith.constant 0 : i32
    %c0_i32_0 = arith.constant 0 : i32
    %c0_i32_1 = arith.constant 0 : i32
    return %c0_i32, %c0_i32_0 : i32, i32
  }
  func.func @transform_3(%arg0: i32) -> (i32, i32) {
    %c0_i32 = arith.constant 0 : i32
    %c0_i32_0 = arith.constant 0 : i32
    %c0_i32_1 = arith.constant 0 : i32
    return %c0_i32, %c0_i32_0 : i32, i32
  }
  func.func @transform_4(%arg0: i32) -> (i32, i32, i32) {
    %c0_i32 = arith.constant 0 : i32
    %c0_i32_0 = arith.constant 0 : i32
    %c0_i32_1 = arith.constant 0 : i32
    return %arg0, %c0_i32, %c0_i32_0 : i32, i32, i32
  }
}

</mosaic_0001>

<llo_original>
// kernel: tpu_custom_call.1
$region0: #{tpu_custom_call.1}
  #allocation0 [shape = 'u32[]', space=smem, size = 0x4, offset = 0x4, fixed_abs, tag = 'smem constant byte address 0x4 - core index']
  #allocation1 [shape = 'u32[144,128]{1,0:T(1,128)}', space=vmem, size = 0x12000, scoped, tag = 'internal scratch']
  #allocation2 [shape = 'f32[8,256]{1,0:T(8,128)}', space=vmem, size = 0x2000, scoped, tag = 'scratch operand']
  #allocation3 [shape = 'f32[128,256]{1,0:T(8,128)}', space=vmem, size = 0x20000, scoped, tag = 'scratch operand']
  %s0 = inlined_call_operand.vmem [shape: f32[2,4,16], index: 0, kind: input, shape index: {}]
  %s1 = inlined_call_operand.vmem [shape: f32[128,8], index: 1, kind: input, shape index: {}]
  %s2 = inlined_call_operand.vmem [shape: f32[8,1], index: 2, kind: input, shape index: {}]
  %s3 = inlined_call_operand.vmem [shape: f32[8,1], index: 3, kind: input, shape index: {}]
  %s4 = inlined_call_operand.hbm [shape: f32[2,8,128], index: 4, kind: output, shape index: {}]
  %s5 = sld [smem:[#allocation0]]
  $region49: #{tpu_custom_call.1} parent=0
    _
  %s7 = ssub.s32 1, %s5
  %s8 = scalar_select 0, %s7, %s5
  $region1: #{tpu_custom_call.1} parent=0
    #allocation4 [shape = 'u8[8192]{0}', space=vmem, size = 0x2000, scoped, tag = 'output window, operand 0']
    #allocation5 [shape = 's32[2]{0}', space=sflag, size = 0x8, scoped, tag = 'scoped memory for tpu_custom_call.1']
    %9 = vsyncpa [#allocation5], 0
    %s10 = scalar_lea.sflag [#allocation5], 1
    %11 = vsyncpa %s10, 0
    loop: start=0, step=1, limit=4
    $region2: #{tpu_custom_call.1} parent=1 // loop_pre_header
      _
    $region3: #{tpu_custom_call.1} parent=1 // loop_header
      %s13 = sphi 0, %s17
      %p14 = scmp.ge.s32.totalorder %s13, 4
      %s23 = sphi 0, %s25
      %s26 = sphi 0, %s23
      %s27 = sphi 0, %s26
      %s43 = sphi 0, %s27
      %s47 = sphi 0, %s47
      %s49 = sphi 0, %s47
      %s50 = sphi 0, %s49
      %s64 = sphi 0, %s50
      %s68 = sphi 0, %s68
      %s70 = sphi 0, %s68
      %s71 = sphi 0, %s70
      %s85 = sphi 0, %s71
      %s89 = sphi 0, %s89
      %s91 = sphi 0, %s89
      %s92 = sphi 0, %s91
      %s106 = sphi 0, %s92
      %s112 = sphi 0, %s114
      %s115 = sphi 0, %s112
      %s116 = sphi 0, %s115
      %s132 = sphi 0, %s116
    $region4: #{tpu_custom_call.1} parent=1 // loop_header_branch
      %16 = sbr.rel (%p14) target = $region8
    $region5: #{tpu_custom_call.1} parent=1 // loop_body
      %s18 = ssub.s32 %s13, 1
      %s19 = ssub.s32 %s13, 2
      %s20 = sadd.s32 %s13, 1
      %s21 = ssub.s32 %s13, %s20
      %p22 = scmp.eq.s32.totalorder %s21, 0
      %s24 = sadd.s32 %s23, 1
      %s25 = scalar_select %p22, %s23, %s24
      %p28 = pneg %p22
      %p29 = scmp.eq.s32.totalorder %s13, 1
      %p30 = por %p28, %p29
      %p31 = scmp.ne.s32.totalorder %s23, %s26
      %p32 = scmp.eq.s32.totalorder %s13, 0
      %p33 = por %p31, %p32
      %p34 = scmp.ne.s32.totalorder %s23, %s26
      %p35 = scmp.eq.s32.totalorder %s18, 1
      %p36 = por %p34, %p35
      %p37 = scmp.ne.s32.totalorder %s26, %s27
      %p38 = scmp.eq.s32.totalorder %s18, 0
      %p39 = por %p37, %p38
      %p40 = scmp.ne.s32.totalorder %s26, %s27
      %p41 = scmp.eq.s32.totalorder %s19, 1
      %p42 = por %p40, %p41
      %p44 = scmp.ne.s32.totalorder %s27, %s43
      %p45 = scmp.eq.s32.totalorder %s19, 0
      %p46 = por %p44, %p45
      %s48 = sadd.s32 %s47, 1
      %p51 = scmp.eq.s32.totalorder %s13, 1
      %p52 = scmp.ne.s32.totalorder %s47, %s49
      %p53 = scmp.eq.s32.totalorder %s13, 0
      %p54 = por %p52, %p53
      %p55 = scmp.ne.s32.totalorder %s47, %s49
      %p56 = scmp.eq.s32.totalorder %s18, 1
      %p57 = por %p55, %p56
      %p58 = scmp.ne.s32.totalorder %s49, %s50
      %p59 = scmp.eq.s32.totalorder %s18, 0
      %p60 = por %p58, %p59
      %p61 = scmp.ne.s32.totalorder %s49, %s50
      %p62 = scmp.eq.s32.totalorder %s19, 1
      %p63 = por %p61, %p62
      %p65 = scmp.ne.s32.totalorder %s50, %s64
      %p66 = scmp.eq.s32.totalorder %s19, 0
      %p67 = por %p65, %p66
      %s69 = sadd.s32 %s68, 1
      %p72 = scmp.eq.s32.totalorder %s13, 1
      %p73 = scmp.ne.s32.totalorder %s68, %s70
      %p74 = scmp.eq.s32.totalorder %s13, 0
      %p75 = por %p73, %p74
      %p76 = scmp.ne.s32.totalorder %s68, %s70
      %p77 = scmp.eq.s32.totalorder %s18, 1
      %p78 = por %p76, %p77
      %p79 = scmp.ne.s32.totalorder %s70, %s71
      %p80 = scmp.eq.s32.totalorder %s18, 0
      %p81 = por %p79, %p80
      %p82 = scmp.ne.s32.totalorder %s70, %s71
      %p83 = scmp.eq.s32.totalorder %s19, 1
      %p84 = por %p82, %p83
      %p86 = scmp.ne.s32.totalorder %s71, %s85
      %p87 = scmp.eq.s32.totalorder %s19, 0
      %p88 = por %p86, %p87
      %s90 = sadd.s32 %s89, 1
      %p93 = scmp.eq.s32.totalorder %s13, 1
      %p94 = scmp.ne.s32.totalorder %s89, %s91
      %p95 = scmp.eq.s32.totalorder %s13, 0
      %p96 = por %p94, %p95
      %p97 = scmp.ne.s32.totalorder %s89, %s91
      %p98 = scmp.eq.s32.totalorder %s18, 1
      %p99 = por %p97, %p98
      %p100 = scmp.ne.s32.totalorder %s91, %s92
      %p101 = scmp.eq.s32.totalorder %s18, 0
      %p102 = por %p100, %p101
      %p103 = scmp.ne.s32.totalorder %s91, %s92
      %p104 = scmp.eq.s32.totalorder %s19, 1
      %p105 = por %p103, %p104
      %p107 = scmp.ne.s32.totalorder %s92, %s106
      %p108 = scmp.eq.s32.totalorder %s19, 0
      %p109 = por %p107, %p108
      %s110 = ssub.s32 %s13, %s20
      %p111 = scmp.eq.s32.totalorder %s110, 0
      %s113 = sadd.s32 %s112, 1
      %s114 = scalar_select %p111, %s112, %s113
      %p117 = pneg %p111
      %p118 = scmp.eq.s32.totalorder %s13, 1
      %p119 = por %p117, %p118
      %p120 = scmp.ne.s32.totalorder %s112, %s115
      %p121 = scmp.eq.s32.totalorder %s13, 0
      %p122 = por %p120, %p121
      %p123 = scmp.ne.s32.totalorder %s112, %s115
      %p124 = scmp.eq.s32.totalorder %s18, 1
      %p125 = por %p123, %p124
      %p126 = scmp.ne.s32.totalorder %s115, %s116
      %p127 = scmp.eq.s32.totalorder %s18, 0
      %p128 = por %p126, %p127
      %p129 = scmp.ne.s32.totalorder %s115, %s116
      %p130 = scmp.eq.s32.totalorder %s19, 1
      %p131 = por %p129, %p130
      %p133 = scmp.ne.s32.totalorder %s116, %s132
      %p134 = scmp.eq.s32.totalorder %s19, 0
      %p135 = por %p133, %p134
      %p136 = scmp.le.s32.totalorder 1, %s13
      %p137 = scmp.lt.s32.totalorder %s13, 3
      %p138 = pnand %p136, %p137
      %p139 = pneg %p138
      // Predicated region
      $region9: #{tpu_custom_call.1} parent=5 // pred_check
        _
      $region10: #{tpu_custom_call.1} parent=5 // pred_check_branch
        %141 = sbr.rel (%p138) target = $region12
      $region11: #{tpu_custom_call.1} parent=5 // pred_region
        %s142 = ssub.s32 %s13, 1
        // Predicated region
        $region13: #{tpu_custom_call.1} parent=11 // pred_check
          %p143 = pneg %p60
        $region14: #{tpu_custom_call.1} parent=11 // pred_check_branch
          %145 = sbr.rel (%p143) target = $region16
        $region15: #{tpu_custom_call.1} parent=11 // pred_region
          _
        $region16: #{tpu_custom_call.1} parent=11 // pred_fallthru
          _
        // Predicated region
        $region17: #{tpu_custom_call.1} parent=11 // pred_check
          %p146 = pneg %p81
        $region18: #{tpu_custom_call.1} parent=11 // pred_check_branch
          %148 = sbr.rel (%p146) target = $region20
        $region19: #{tpu_custom_call.1} parent=11 // pred_region
          _
        $region20: #{tpu_custom_call.1} parent=11 // pred_fallthru
          _
        // Predicated region
        $region21: #{tpu_custom_call.1} parent=11 // pred_check
          %p149 = pneg %p102
        $region22: #{tpu_custom_call.1} parent=11 // pred_check_branch
          %151 = sbr.rel (%p149) target = $region24
        $region23: #{tpu_custom_call.1} parent=11 // pred_region
          _
        $region24: #{tpu_custom_call.1} parent=11 // pred_fallthru
          _
      $region12: #{tpu_custom_call.1} parent=5 // pred_fallthru
        _
      %p152 = scmp.lt.s32.totalorder %s13, 2
      // Predicated region
      $region25: #{tpu_custom_call.1} parent=5 // pred_check
        %p153 = pneg %p152
      $region26: #{tpu_custom_call.1} parent=5 // pred_check_branch
        %155 = sbr.rel (%p153) target = $region28
      $region27: #{tpu_custom_call.1} parent=5 // pred_region
        // Predicated region
        $region29: #{tpu_custom_call.1} parent=27 // pred_check
          %p156 = pneg %p33
        $region30: #{tpu_custom_call.1} parent=27 // pred_check_branch
          %158 = sbr.rel (%p156) target = $region32
        $region31: #{tpu_custom_call.1} parent=27 // pred_region
          %p159 = scmp.lt.s32.totalorder %s13, 1
          %s160 = scalar_select %p159, %s13, 1
          %s161 = smul.addr %s160, 4
          %s162 = scalar_lea.vmem %s0, %s161
        $region32: #{tpu_custom_call.1} parent=27 // pred_fallthru
          _
      $region28: #{tpu_custom_call.1} parent=5 // pred_fallthru
        _
      %p163 = scmp.le.s32.totalorder 1, %s13
      %p164 = scmp.lt.s32.totalorder %s13, 3
      %p165 = pnand %p163, %p164
      %p166 = pneg %p165
      // Predicated region
      $region33: #{tpu_custom_call.1} parent=5 // pred_check
        _
      $region34: #{tpu_custom_call.1} parent=5 // pred_check_branch
        %168 = sbr.rel (%p165) target = $region36
      $region35: #{tpu_custom_call.1} parent=5 // pred_region
        %s169 = ssub.s32 %s13, 1
        %p170 = scmp.lt.s32.totalorder %s18, 1
        %s171 = scalar_select %p170, %s18, 1
        %s172 = smul.addr %s171, 4
        %s173 = scalar_lea.vmem %s0, %s172
        %p174 = pneg %p39
        %p175 = pneg %p36
        %p176 = pneg %p60
        %p177 = pneg %p57
        %p178 = pneg %p81
        %p179 = pneg %p78
        %p180 = pneg %p102
        %p181 = pneg %p99
        %p182 = pneg %p128
        %p183 = pneg %p125
        %s184 = sand.u32 %s115, 1
        %s185 = scalar_lea.sflag [#allocation5], %s184
        %s186 = sand.u32 %s115, 1
        %s187 = smul.addr %s186, 8
        %s188 = scalar_lea.vmem [#allocation4], %s187
        %p189 = scmp.lt.s32.totalorder %s18, 1
        %s190 = scalar_select %p189, %s18, 1
        %s191 = smul.addr %s190, 4
        %s192 = scalar_lea.vmem %s0, %s191
        %193 = vst [vmem:[#allocation2] sm:$0xf0] 0.0
        %194 = vst [vmem:[#allocation2 + $0x8] sm:$0xf0] 0.0
        %vm195 = vcmask 60416
        %196 = vst.msk [vmem:[#allocation2] sm:$0xf] %vm195, 0.0
        %vm197 = vcmask 1043648
        %198 = vst.msk [vmem:[#allocation2] sm:$0xf] %vm197, 0.0
        %199 = vst [vmem:[#allocation2 + $0x8] sm:$0xf] 0.0
        %v200 = vld [vmem:[%s192] sm:$0xf]
        %202 = vrot.lane.b32.xlu0 %v200, 8
        %v203 = vpop.permute.xlu0 %202
        %vm205 = vcmask 191552
        %206 = vst.msk [vmem:[#allocation2] sm:$0xf] %vm205, %v203
        %v207 = vld [vmem:[%s1] sm:$0xff]
        %v208 = vld [vmem:[%s1 + $0x8] sm:$0xff]
        %v209 = vld [vmem:[%s1 + $0x10] sm:$0xff]
        %v210 = vld [vmem:[%s1 + $0x18] sm:$0xff]
        %v211 = vld [vmem:[%s1 + $0x20] sm:$0xff]
        %v212 = vld [vmem:[%s1 + $0x28] sm:$0xff]
        %v213 = vld [vmem:[%s1 + $0x30] sm:$0xff]
        %v214 = vld [vmem:[%s1 + $0x38] sm:$0xff]
        %v215 = vld [vmem:[%s1 + $0x40] sm:$0xff]
        %v216 = vld [vmem:[%s1 + $0x48] sm:$0xff]
        %v217 = vld [vmem:[%s1 + $0x50] sm:$0xff]
        %v218 = vld [vmem:[%s1 + $0x58] sm:$0xff]
        %v219 = vld [vmem:[%s1 + $0x60] sm:$0xff]
        %v220 = vld [vmem:[%s1 + $0x68] sm:$0xff]
        %v221 = vld [vmem:[%s1 + $0x70] sm:$0xff]
        %v222 = vld [vmem:[%s1 + $0x78] sm:$0xff]
        %v223 = vld [vmem:[#allocation2] sm:$0xff]
        %v224 = vld [vmem:[#allocation2 + $0x8] sm:$0xff]
        %vm225 = vcmask 64512
        %v227 = vsel %vm225, %v207, 0
        %v230 = vsel %vm225, %v208, 0
        %v233 = vsel %vm225, %v209, 0
        %v236 = vsel %vm225, %v210, 0
        %v239 = vsel %vm225, %v211, 0
        %v242 = vsel %vm225, %v212, 0
        %v245 = vsel %vm225, %v213, 0
        %v248 = vsel %vm225, %v214, 0
        %v251 = vsel %vm225, %v215, 0
        %v254 = vsel %vm225, %v216, 0
        %v257 = vsel %vm225, %v217, 0
        %v260 = vsel %vm225, %v218, 0
        %v263 = vsel %vm225, %v219, 0
        %v266 = vsel %vm225, %v220, 0
        %v269 = vsel %vm225, %v221, 0
        %v272 = vsel %vm225, %v222, 0
        %274 = vmatprep.subr.mxu0 %v224
        %275 = vmatpush1.msra.mxu0 %v223
        %276 = vmatprep.subr.mxu0 0.0
        %277 = vmatpush1.msra.mxu0 0.0
        %278 = vmatprep.subr.mxu0 0.0
        %279 = vmatpush1.msra.mxu0 0.0
        %280 = vmatprep.subr.mxu0 0.0
        %281 = vmatpush1.msra.mxu0 0.0
        %282 = vmatprep.subr.mxu0 0.0
        %283 = vmatpush1.msra.mxu0 0.0
        %284 = vmatprep.subr.mxu0 0.0
        %285 = vmatpush1.msra.mxu0 0.0
        %286 = vmatprep.subr.mxu0 0.0
        %287 = vmatpush1.msra.mxu0 0.0
        %288 = vmatprep.subr.mxu0 0.0
        %289 = vmatpush1.msra.mxu0 0.0
        %290 = vmatprep.subr.mxu0 0.0
        %291 = vmatpush1.msra.mxu0 0.0
        %292 = vmatprep.subr.mxu0 0.0
        %293 = vmatpush1.msra.mxu0 0.0
        %294 = vmatprep.subr.mxu0 0.0
        %295 = vmatpush1.msra.mxu0 0.0
        %296 = vmatprep.subr.mxu0 0.0
        %297 = vmatpush1.msra.mxu0 0.0
        %298 = vmatprep.subr.mxu0 0.0
        %299 = vmatpush1.msra.mxu0 0.0
        %300 = vmatprep.subr.mxu0 0.0
        %301 = vmatpush1.msra.mxu0 0.0
        %302 = vmatprep.subr.mxu0 0.0
        %303 = vmatpush1.msra.mxu0 0.0
        %304 = vmatprep.subr.mxu0 0.0
        %305 = vmatpush1.msra.mxu0 0.0
        %306 = vmatprep.subr.mxu0 0.0
        %307 = vmatpush1.msra.mxu0 0.0
        %308 = vmatprep.subr.mxu0 0.0
        %309 = vmatpush1.msra.mxu0 0.0
        %310 = vmatprep.subr.mxu0 0.0
        %311 = vmatpush1.msra.mxu0 0.0
        %312 = vmatprep.subr.mxu0 0.0
        %313 = vmatpush1.msra.mxu0 0.0
        %314 = vmatprep.subr.mxu0 0.0
        %315 = vmatpush1.msra.mxu0 0.0
        %316 = vmatprep.subr.mxu0 0.0
        %317 = vmatpush1.msra.mxu0 0.0
        %318 = vmatprep.subr.mxu0 0.0
        %319 = vmatpush1.msra.mxu0 0.0
        %320 = vmatprep.subr.mxu0 0.0
        %321 = vmatpush1.msra.mxu0 0.0
        %322 = vmatprep.subr.mxu0 0.0
        %323 = vmatpush1.msra.mxu0 0.0
        %324 = vmatprep.subr.mxu0 0.0
        %325 = vmatpush1.msra.mxu0 0.0
        %326 = vmatprep.subr.mxu0 0.0
        %327 = vmatpush1.msra.mxu0 0.0
        %328 = vmatprep.subr.mxu0 0.0
        %329 = vmatpush1.msra.mxu0 0.0
        %330 = vmatprep.subr.mxu0 0.0
        %331 = vmatpush1.msra.mxu0 0.0
        %332 = vmatprep.subr.mxu0 0.0
        %333 = vmatpush1.msra.mxu0 0.0
        %334 = vmatprep.subr.mxu0 0.0
        %335 = vmatpush1.msra.mxu0 0.0
        %336 = vmatprep.subr.mxu0 0.0
        %337 = vmatpush1.msra.mxu0 0.0
        %338 = vmatprep.mubr.f32.mxu0 0.0
        %339 = vmatmul.mubr.f32.gmra.mrb[0].mxu0 %v227
        %v340 = vpop.f32.mrb[0].mxu0
        %v341 = vadd.f32 0.0, %v340
        %v342 = vpop.f32.mrb[0].mxu0
        %v343 = vadd.f32 0.0, %v342
        %344 = vmatprep.mubr.f32.mxu0 0.0
        %345 = vmatmul.mubr.f32.gmra.mrb[0].mxu0 %v230
        %v346 = vpop.f32.mrb[0].mxu0
        %v347 = vadd.f32 0.0, %v346
        %v348 = vpop.f32.mrb[0].mxu0
        %v349 = vadd.f32 0.0, %v348
        %350 = vmatprep.mubr.f32.mxu0 0.0
        %351 = vmatmul.mubr.f32.gmra.mrb[0].mxu0 %v233
        %v352 = vpop.f32.mrb[0].mxu0
        %v353 = vadd.f32 0.0, %v352
        %v354 = vpop.f32.mrb[0].mxu0
        %v355 = vadd.f32 0.0, %v354
        %356 = vmatprep.mubr.f32.mxu0 0.0
        %357 = vmatmul.mubr.f32.gmra.mrb[0].mxu0 %v236
        %v358 = vpop.f32.mrb[0].mxu0
        %v359 = vadd.f32 0.0, %v358
        %v360 = vpop.f32.mrb[0].mxu0
        %v361 = vadd.f32 0.0, %v360
        %362 = vmatprep.mubr.f32.mxu0 0.0
        %363 = vmatmul.mubr.f32.gmra.mrb[0].mxu0 %v239
        %v364 = vpop.f32.mrb[0].mxu0
        %v365 = vadd.f32 0.0, %v364
        %v366 = vpop.f32.mrb[0].mxu0
        %v367 = vadd.f32 0.0, %v366
        %368 = vmatprep.mubr.f32.mxu0 0.0
        %369 = vmatmul.mubr.f32.gmra.mrb[0].mxu0 %v242
        %v370 = vpop.f32.mrb[0].mxu0
        %v371 = vadd.f32 0.0, %v370
        %v372 = vpop.f32.mrb[0].mxu0
        %v373 = vadd.f32 0.0, %v372
        %374 = vmatprep.mubr.f32.mxu0 0.0
        %375 = vmatmul.mubr.f32.gmra.mrb[0].mxu0 %v245
        %v376 = vpop.f32.mrb[0].mxu0
        %v377 = vadd.f32 0.0, %v376
        %v378 = vpop.f32.mrb[0].mxu0
        %v379 = vadd.f32 0.0, %v378
        %380 = vmatprep.mubr.f32.mxu0 0.0
        %381 = vmatmul.mubr.f32.gmra.mrb[0].mxu0 %v248
        %v382 = vpop.f32.mrb[0].mxu0
        %v383 = vadd.f32 0.0, %v382
        %v384 = vpop.f32.mrb[0].mxu0
        %v385 = vadd.f32 0.0, %v384
        %386 = vmatprep.mubr.f32.mxu0 0.0
        %387 = vmatmul.mubr.f32.gmra.mrb[0].mxu0 %v251
        %v388 = vpop.f32.mrb[0].mxu0
        %v389 = vadd.f32 0.0, %v388
        %v390 = vpop.f32.mrb[0].mxu0
        %v391 = vadd.f32 0.0, %v390
        %392 = vmatprep.mubr.f32.mxu0 0.0
        %393 = vmatmul.mubr.f32.gmra.mrb[0].mxu0 %v254
        %v394 = vpop.f32.mrb[0].mxu0
        %v395 = vadd.f32 0.0, %v394
        %v396 = vpop.f32.mrb[0].mxu0
        %v397 = vadd.f32 0.0, %v396
        %398 = vmatprep.mubr.f32.mxu0 0.0
        %399 = vmatmul.mubr.f32.gmra.mrb[0].mxu0 %v257
        %v400 = vpop.f32.mrb[0].mxu0
        %v401 = vadd.f32 0.0, %v400
        %v402 = vpop.f32.mrb[0].mxu0
        %v403 = vadd.f32 0.0, %v402
        %404 = vmatprep.mubr.f32.mxu0 0.0
        %405 = vmatmul.mubr.f32.gmra.mrb[0].mxu0 %v260
        %v406 = vpop.f32.mrb[0].mxu0
        %v407 = vadd.f32 0.0, %v406
        %v408 = vpop.f32.mrb[0].mxu0
        %v409 = vadd.f32 0.0, %v408
        %410 = vmatprep.mubr.f32.mxu0 0.0
        %411 = vmatmul.mubr.f32.gmra.mrb[0].mxu0 %v263
        %v412 = vpop.f32.mrb[0].mxu0
        %v413 = vadd.f32 0.0, %v412
        %v414 = vpop.f32.mrb[0].mxu0
        %v415 = vadd.f32 0.0, %v414
        %416 = vmatprep.mubr.f32.mxu0 0.0
        %417 = vmatmul.mubr.f32.gmra.mrb[0].mxu0 %v266
        %v418 = vpop.f32.mrb[0].mxu0
        %v419 = vadd.f32 0.0, %v418
        %v420 = vpop.f32.mrb[0].mxu0
        %v421 = vadd.f32 0.0, %v420
        %422 = vmatprep.mubr.f32.mxu0 0.0
        %423 = vmatmul.mubr.f32.gmra.mrb[0].mxu0 %v269
        %v424 = vpop.f32.mrb[0].mxu0
        %v425 = vadd.f32 0.0, %v424
        %v426 = vpop.f32.mrb[0].mxu0
        %v427 = vadd.f32 0.0, %v426
        %428 = vmatprep.mubr.f32.mxu0 0.0
        %429 = vmatmul.mubr.f32.gmra.mrb[0].mxu0 %v272
        %v430 = vpop.f32.mrb[0].mxu0
        %v431 = vadd.f32 0.0, %v430
        %v432 = vpop.f32.mrb[0].mxu0
        %v433 = vadd.f32 0.0, %v432
        %434 = vdwg.mxu0
        %435 = vst [vmem:[#allocation3] sm:$0xff] %v341
        %436 = vst [vmem:[#allocation3 + $0x8] sm:$0xff] %v343
        %437 = vst [vmem:[#allocation3 + $0x10] sm:$0xff] %v347
        %438 = vst [vmem:[#allocation3 + $0x18] sm:$0xff] %v349
        %439 = vst [vmem:[#allocation3 + $0x20] sm:$0xff] %v353
        %440 = vst [vmem:[#allocation3 + $0x28] sm:$0xff] %v355
        %441 = vst [vmem:[#allocation3 + $0x30] sm:$0xff] %v359
        %442 = vst [vmem:[#allocation3 + $0x38] sm:$0xff] %v361
        %443 = vst [vmem:[#allocation3 + $0x40] sm:$0xff] %v365
        %444 = vst [vmem:[#allocation3 + $0x48] sm:$0xff] %v367
        %445 = vst [vmem:[#allocation3 + $0x50] sm:$0xff] %v371
        %446 = vst [vmem:[#allocation3 + $0x58] sm:$0xff] %v373
        %447 = vst [vmem:[#allocation3 + $0x60] sm:$0xff] %v377
        %448 = vst [vmem:[#allocation3 + $0x68] sm:$0xff] %v379
        %449 = vst [vmem:[#allocation3 + $0x70] sm:$0xff] %v383
        %450 = vst [vmem:[#allocation3 + $0x78] sm:$0xff] %v385
        %451 = vst [vmem:[#allocation3 + $0x80] sm:$0xff] %v389
        %452 = vst [vmem:[#allocation3 + $0x88] sm:$0xff] %v391
        %453 = vst [vmem:[#allocation3 + $0x90] sm:$0xff] %v395
        %454 = vst [vmem:[#allocation3 + $0x98] sm:$0xff] %v397
        %455 = vst [vmem:[#allocation3 + $0xa0] sm:$0xff] %v401
        %456 = vst [vmem:[#allocation3 + $0xa8] sm:$0xff] %v403
        %457 = vst [vmem:[#allocation3 + $0xb0] sm:$0xff] %v407
        %458 = vst [vmem:[#allocation3 + $0xb8] sm:$0xff] %v409
        %459 = vst [vmem:[#allocation3 + $0xc0] sm:$0xff] %v413
        %460 = vst [vmem:[#allocation3 + $0xc8] sm:$0xff] %v415
        %461 = vst [vmem:[#allocation3 + $0xd0] sm:$0xff] %v419
        %462 = vst [vmem:[#allocation3 + $0xd8] sm:$0xff] %v421
        %463 = vst [vmem:[#allocation3 + $0xe0] sm:$0xff] %v425
        %464 = vst [vmem:[#allocation3 + $0xe8] sm:$0xff] %v427
        %465 = vst [vmem:[#allocation3 + $0xf0] sm:$0xff] %v431
        %466 = vst [vmem:[#allocation3 + $0xf8] sm:$0xff] %v433
        %v467 = vld [vmem:[#allocation3] sm:$0xff]
        %v468 = vld [vmem:[#allocation3 + $0x10] sm:$0xff]
        %v469 = vld [vmem:[#allocation3 + $0x18] sm:$0xff]
        %472 = vrot.lane.b32.xlu0 %v468, 127
        %v473 = vpop.permute.xlu0 %472
        %474 = vrot.lane.b32.xlu0 %v469, 127
        %v475 = vpop.permute.xlu0 %474
        %vm476 = vcmask 1039360
        %v477 = vsel %vm476, %v473, %v475
        %v479 = vadd.f32 %v467, %v477
        %v480 = vld [vmem:[#allocation3 + $0x20] sm:$0xff]
        %v481 = vld [vmem:[#allocation3 + $0x28] sm:$0xff]
        %484 = vrot.lane.b32.xlu0 %v480, 126
        %v485 = vpop.permute.xlu0 %484
        %486 = vrot.lane.b32.xlu0 %v481, 126
        %v487 = vpop.permute.xlu0 %486
        %vm488 = vcmask 1031168
        %v489 = vsel %vm488, %v485, %v487
        %v491 = vadd.f32 %v479, %v489
        %v492 = vld [vmem:[#allocation3 + $0x30] sm:$0xff]
        %v493 = vld [vmem:[#allocation3 + $0x38] sm:$0xff]
        %496 = vrot.lane.b32.xlu0 %v492, 125
        %v497 = vpop.permute.xlu0 %496
        %498 = vrot.lane.b32.xlu0 %v493, 125
        %v499 = vpop.permute.xlu0 %498
        %vm500 = vcmask 1022976
        %v501 = vsel %vm500, %v497, %v499
        %v503 = vadd.f32 %v491, %v501
        %v504 = vld [vmem:[#allocation3 + $0x40] sm:$0xff]
        %v505 = vld [vmem:[#allocation3 + $0x48] sm:$0xff]
        %508 = vrot.lane.b32.xlu0 %v504, 124
        %v509 = vpop.permute.xlu0 %508
        %510 = vrot.lane.b32.xlu0 %v505, 124
        %v511 = vpop.permute.xlu0 %510
        %vm512 = vcmask 1014784
        %v513 = vsel %vm512, %v509, %v511
        %v515 = vadd.f32 %v503, %v513
        %v516 = vld [vmem:[#allocation3 + $0x50] sm:$0xff]
        %v517 = vld [vmem:[#allocation3 + $0x58] sm:$0xff]
        %520 = vrot.lane.b32.xlu0 %v516, 123
        %v521 = vpop.permute.xlu0 %520
        %522 = vrot.lane.b32.xlu0 %v517, 123
        %v523 = vpop.permute.xlu0 %522
        %vm524 = vcmask 1006592
        %v525 = vsel %vm524, %v521, %v523
        %v527 = vadd.f32 %v515, %v525
        %v528 = vld [vmem:[#allocation3 + $0x60] sm:$0xff]
        %v529 = vld [vmem:[#allocation3 + $0x68] sm:$0xff]
        %532 = vrot.lane.b32.xlu0 %v528, 122
        %v533 = vpop.permute.xlu0 %532
        %534 = vrot.lane.b32.xlu0 %v529, 122
        %v535 = vpop.permute.xlu0 %534
        %vm536 = vcmask 998400
        %v537 = vsel %vm536, %v533, %v535
        %v539 = vadd.f32 %v527, %v537
        %v540 = vld [vmem:[#allocation3 + $0x70] sm:$0xff]
        %v541 = vld [vmem:[#allocation3 + $0x78] sm:$0xff]
        %544 = vrot.lane.b32.xlu0 %v540, 121
        %v545 = vpop.permute.xlu0 %544
        %546 = vrot.lane.b32.xlu0 %v541, 121
        %v547 = vpop.permute.xlu0 %546
        %vm548 = vcmask 990208
        %v549 = vsel %vm548, %v545, %v547
        %v551 = vadd.f32 %v539, %v549
        %v552 = vld [vmem:[#allocation3 + $0x80] sm:$0xff]
        %v553 = vld [vmem:[#allocation3 + $0x88] sm:$0xff]
        %556 = vrot.lane.b32.xlu0 %v552, 120
        %v557 = vpop.permute.xlu0 %556
        %558 = vrot.lane.b32.xlu0 %v553, 120
        %v559 = vpop.permute.xlu0 %558
        %vm560 = vcmask 982016
        %v561 = vsel %vm560, %v557, %v559
        %v563 = vadd.f32 %v551, %v561
        %v564 = vld [vmem:[#allocation3 + $0x90] sm:$0xff]
        %v565 = vld [vmem:[#allocation3 + $0x98] sm:$0xff]
        %568 = vrot.lane.b32.xlu0 %v564, 119
        %v569 = vpop.permute.xlu0 %568
        %570 = vrot.lane.b32.xlu0 %v565, 119
        %v571 = vpop.permute.xlu0 %570
        %vm572 = vcmask 973824
        %v573 = vsel %vm572, %v569, %v571
        %v575 = vadd.f32 %v563, %v573
        %v576 = vld [vmem:[#allocation3 + $0xa0] sm:$0xff]
        %v577 = vld [vmem:[#allocation3 + $0xa8] sm:$0xff]
        %580 = vrot.lane.b32.xlu0 %v576, 118
        %v581 = vpop.permute.xlu0 %580
        %582 = vrot.lane.b32.xlu0 %v577, 118
        %v583 = vpop.permute.xlu0 %582
        %vm584 = vcmask 965632
        %v585 = vsel %vm584, %v581, %v583
        %v587 = vadd.f32 %v575, %v585
        %v588 = vld [vmem:[#allocation3 + $0xb0] sm:$0xff]
        %v589 = vld [vmem:[#allocation3 + $0xb8] sm:$0xff]
        %592 = vrot.lane.b32.xlu0 %v588, 117
        %v593 = vpop.permute.xlu0 %592
        %594 = vrot.lane.b32.xlu0 %v589, 117
        %v595 = vpop.permute.xlu0 %594
        %vm596 = vcmask 957440
        %v597 = vsel %vm596, %v593, %v595
        %v599 = vadd.f32 %v587, %v597
        %v600 = vld [vmem:[#allocation3 + $0xc0] sm:$0xff]
        %v601 = vld [vmem:[#allocation3 + $0xc8] sm:$0xff]
        %604 = vrot.lane.b32.xlu0 %v600, 116
        %v605 = vpop.permute.xlu0 %604
        %606 = vrot.lane.b32.xlu0 %v601, 116
        %v607 = vpop.permute.xlu0 %606
        %vm608 = vcmask 949248
        %v609 = vsel %vm608, %v605, %v607
        %v611 = vadd.f32 %v599, %v609
        %v612 = vld [vmem:[#allocation3 + $0xd0] sm:$0xff]
        %v613 = vld [vmem:[#allocation3 + $0xd8] sm:$0xff]
        %616 = vrot.lane.b32.xlu0 %v612, 115
        %v617 = vpop.permute.xlu0 %616
        %618 = vrot.lane.b32.xlu0 %v613, 115
        %v619 = vpop.permute.xlu0 %618
        %vm620 = vcmask 941056
        %v621 = vsel %vm620, %v617, %v619
        %v623 = vadd.f32 %v611, %v621
        %v624 = vld [vmem:[#allocation3 + $0xe0] sm:$0xff]
        %v625 = vld [vmem:[#allocation3 + $0xe8] sm:$0xff]
        %628 = vrot.lane.b32.xlu0 %v624, 114
        %v629 = vpop.permute.xlu0 %628
        %630 = vrot.lane.b32.xlu0 %v625, 114
        %v631 = vpop.permute.xlu0 %630
        %vm632 = vcmask 932864
        %v633 = vsel %vm632, %v629, %v631
        %v635 = vadd.f32 %v623, %v633
        %v636 = vld [vmem:[#allocation3 + $0xf0] sm:$0xff]
        %v637 = vld [vmem:[#allocation3 + $0xf8] sm:$0xff]
        %640 = vrot.lane.b32.xlu0 %v636, 113
        %v641 = vpop.permute.xlu0 %640
        %642 = vrot.lane.b32.xlu0 %v637, 113
        %v643 = vpop.permute.xlu0 %642
        %vm644 = vcmask 924672
        %v645 = vsel %vm644, %v641, %v643
        %v647 = vadd.f32 %v635, %v645
        %v648 = vld [vmem:[%s2] sm:$0xff]
        %650 = vset.pattern.permute.xlu0 0
        %651 = vperm.xlu0 %650, %v648
        %v652 = vpop.permute.xlu0 %651
        %v654 = vmul.f32 %v647, %v652
        %v655 = vld [vmem:[%s3] sm:$0xff]
        %657 = vset.pattern.permute.xlu0 0
        %658 = vperm.xlu0 %657, %v655
        %v659 = vpop.permute.xlu0 %658
        %v661 = vadd.f32 %v654, %v659
        %v662 = vmax.f32 %v661, 0.0
        %663 = vst [vmem:[%s188] sm:$0xff] %v662
        %s664 = sand.u32 %s115, 1
        %s665 = scalar_lea.sflag [#allocation5], %s664
        %s666 = sand.u32 %s115, 1
        %s667 = smul.addr %s666, 8
        %s668 = scalar_lea.vmem [#allocation4], %s667
        // Predicated region
        $region37: #{tpu_custom_call.1} parent=35 // pred_check
          %p669 = pneg %p125
        $region38: #{tpu_custom_call.1} parent=35 // pred_check_branch
          %671 = sbr.rel (%p669) target = $region40
        $region39: #{tpu_custom_call.1} parent=35 // pred_region
          %s673 = ssub.s32 128, 128
          %674 = vsyncadd %s665, %s673
          %s675 = smul.addr %s18, 128
          %s676 = scalar_lea.hbm %s4, %s675
          %s678 = sshll.u32 %s668, 4
          %s679 = int_to_ptr.vmem [resolvable:$true] %s678
          %681 = dma.vmem_to_hbm [thread:$0]  %s679, 128, %s676, %s665
        $region40: #{tpu_custom_call.1} parent=35 // pred_fallthru
          _
      $region36: #{tpu_custom_call.1} parent=5 // pred_fallthru
        _
      %p682 = scmp.le.s32.totalorder 2, %s13
      // Predicated region
      $region41: #{tpu_custom_call.1} parent=5 // pred_check
        %p683 = pneg %p682
      $region42: #{tpu_custom_call.1} parent=5 // pred_check_branch
        %685 = sbr.rel (%p683) target = $region44
      $region43: #{tpu_custom_call.1} parent=5 // pred_region
        %s686 = ssub.s32 %s13, 2
        // Predicated region
        $region45: #{tpu_custom_call.1} parent=43 // pred_check
          %p687 = pneg %p131
        $region46: #{tpu_custom_call.1} parent=43 // pred_check_branch
          %689 = sbr.rel (%p687) target = $region48
        $region47: #{tpu_custom_call.1} parent=43 // pred_region
          %s690 = sand.u32 %s116, 1
          %s691 = scalar_lea.sflag [#allocation5], %s690
          %s692 = sand.u32 %s116, 1
          %s693 = smul.addr %s692, 8
          %s694 = scalar_lea.vmem [#allocation4], %s693
          %695 = dma.done %s691, 128
        $region48: #{tpu_custom_call.1} parent=43 // pred_fallthru
          _
      $region44: #{tpu_custom_call.1} parent=5 // pred_fallthru
        _
    $region6: #{tpu_custom_call.1} parent=1 // loop_footer
      %s17 = sadd.s32 1, %s13
    $region7: #{tpu_custom_call.1} parent=1 // loop_footer_branch
      %12 = sbr.rel target = $region3
    $region8: #{tpu_custom_call.1} parent=1 // loop_exit
      _
    %696 = vsyncpa [#allocation5], 1
    %s697 = scalar_lea.sflag [#allocation5], 1
    %698 = vsyncpa %s697, 1

</llo_original>
